<compile_context>
chip_gen: v7x
topology: tpu7x:2x2x1
jax: 0.10.0
libtpu: 0.0.40
codegen_flags: <defaults>
</compile_context>

<pallas_src>
import functools

import jax
import jax.numpy as jnp
from jax.experimental import pallas as pl
from jax.experimental.pallas import tpu as pltpu


def advnet_kernel(
    x_ref,
    w_phi_ref, b_phi_ref, s_phi_ref, t_phi_ref,      # trunk Linear + folded BN affine
    w_h1_ref, b_h1_ref,                               # fused head first layer [H, 2H]
    w_h2_ref, b_h2_ref,                               # fused (BN-folded) projection [2H, 2]
    heads_ref, phi_ref,
):
    bf16 = jnp.bfloat16
    x = x_ref[...]

    # ---- phi trunk: Linear -> ReLU -> BN(eval, folded scale/shift) -> Dropout(id) ----
    h = jnp.dot(x.astype(bf16), w_phi_ref[...],
                preferred_element_type=jnp.float32) + b_phi_ref[...]
    h = jnp.maximum(h, 0.0)
    phi = h * s_phi_ref[...] + t_phi_ref[...]
    # bf16 writeback (heaviest HBM stream); f32 `phi` is reused below for the heads.
    phi_ref[...] = phi.astype(phi_ref.dtype)

    # ---- fused task + censoring first layer: Linear(H,2H) -> ReLU ----
    # (the per-head BN affine is folded into w_h2 / b_h2 in fold_params)
    g = jnp.dot(phi.astype(bf16), w_h1_ref[...],
                preferred_element_type=jnp.float32) + b_h1_ref[...]
    g = jnp.maximum(g, 0.0)

    # ---- fused block-diagonal final projections -> (TB, 2) logits -> Sigmoid ----
    z = jnp.dot(g.astype(bf16), w_h2_ref[...],
                preferred_element_type=jnp.float32) + b_h2_ref[...]
    # sigmoid(z) = 0.5*tanh(z/2)+0.5 : one EUP tanh, exact saturation, no inf/NaN for
    # extreme logits or for the padded garbage rows of a ragged last tile.
    heads_ref[...] = 0.5 * jnp.tanh(0.5 * z) + 0.5


def fold_params(params):
    """One-time packing/folding of the PyTorch-equivalent parameters.

    Call once and reuse the result across advnet_forward calls: the concats, BN folds
    and bf16 casts are ~10 small XLA ops + HBM round-trips that would otherwise run on
    every inference call.
    """
    H = params["w_phi"].shape[1]
    bf16 = jnp.bfloat16

    # Fuse the two head first layers into one [H, 2H] weight (task cols 0:H, cens H:2H).
    w_h1 = jnp.concatenate([params["w_t1"], params["w_c1"]], axis=1).astype(bf16)
    b_h1 = jnp.concatenate([params["b_t1"], params["b_c1"]], axis=1)

    # Fold each head's BN affine into its final projection:
    #   (h * s + t) @ w2 + b2 == h @ (s^T * w2) + (t @ w2 + b2)
    w_t2f = params["s_t1"].reshape(H, 1) * params["w_t2"]
    b_t2f = params["t_t1"] @ params["w_t2"] + params["b_t2"]
    w_c2f = params["s_c1"].reshape(H, 1) * params["w_c2"]
    b_c2f = params["t_c1"] @ params["w_c2"] + params["b_c2"]
    zeros = jnp.zeros((H, 1), jnp.float32)
    # Block-diagonal [2H, 2]: column 0 = task, column 1 = censoring.
    w_h2 = jnp.concatenate(
        [jnp.concatenate([w_t2f, zeros], axis=1),
         jnp.concatenate([zeros, w_c2f], axis=1)], axis=0).astype(bf16)
    b_h2 = jnp.concatenate([b_t2f, b_c2f], axis=1)

    folded = dict(
        w_phi=params["w_phi"].astype(bf16),
        b_phi=params["b_phi"], s_phi=params["s_phi"], t_phi=params["t_phi"],
        w_h1=w_h1, b_h1=b_h1, w_h2=w_h2, b_h2=b_h2,
    )
    return jax.tree_util.tree_map(jnp.asarray, folded)


def _round_up(x, m):
    return ((x + m - 1) // m) * m


@functools.partial(jax.jit, static_argnames=("block_b", "phi_dtype"))
def advnet_forward(x, folded, *, block_b=4096, phi_dtype=jnp.bfloat16):
    """Returns (out_task [B], out_censoring [B], out_phi [B, H]) like the PyTorch module.

    `folded` is the output of fold_params(). out_phi is emitted in `phi_dtype`
    (default bf16) to halve the dominant HBM writeback stream.
    """
    B, D = x.shape
    H = folded["w_phi"].shape[1]

    # Batch tile:
    #  * multiple of 8 (sublane constraint on the second-to-last block dim);
    #  * sized from B so the grid has >= 2 tiles whenever B allows it, letting
    #    dimension_semantics=("parallel",) shard the grid over v7x's two TensorCores;
    #  * capped at block_b=4096. VMEM budget at TB=4096, H=128, D=32 (double-buffered):
    #      x 2*0.5 MiB + phi(bf16) 2*1 MiB + heads lane-padded to 128 lanes 2*2 MiB
    #      + weights ~0.3 MiB + f32 temporaries (h/phi ~2 MiB, g ~4 MiB) ~= 14-16 MiB,
    #    comfortably under the 48 MiB limit below and under v7x's 64 MiB physical VMEM.
    TB = min(block_b, max(8, _round_up(pl.cdiv(B, 2), 8)))
    grid = (pl.cdiv(B, TB),)

    def batch_spec(cols):
        return pl.BlockSpec((TB, cols), lambda i: (i, 0))

    def pinned(shape):
        # Same block for every grid step -> stays resident in VMEM across tiles.
        return pl.BlockSpec(shape, lambda i: (0, 0))

    heads, phi = pl.pallas_call(
        advnet_kernel,
        out_shape=(
            jax.ShapeDtypeStruct((B, 2), jnp.float32),   # col 0 = task, col 1 = censoring
            jax.ShapeDtypeStruct((B, H), phi_dtype),
        ),
        grid=grid,
        in_specs=[
            batch_spec(D),
            pinned((D, H)), pinned((1, H)), pinned((1, H)), pinned((1, H)),
            pinned((H, 2 * H)), pinned((1, 2 * H)),
            pinned((2 * H, 2)), pinned((1, 2)),
        ],
        # NOTE: if a trace shows exposed phi-writeback DMA at tile boundaries, add
        # pipeline_mode=pl.Buffered(3) on the phi out_spec only, and sweep 2 vs 3.
        out_specs=(batch_spec(2), batch_spec(H)),
        compiler_params=pltpu.CompilerParams(
            dimension_semantics=("parallel",),     # megacore sharding on v7x
            vmem_limit_bytes=48 << 20,             # above 32 MiB scoped default, < v7x 64 MiB
        ),
    )(x, folded["w_phi"], folded["b_phi"], folded["s_phi"], folded["t_phi"],
      folded["w_h1"], folded["b_h1"], folded["w_h2"], folded["b_h2"])

    # .squeeze(dim=-1) from the PyTorch forward
    return heads[:, 0], heads[:, 1], phi


def _torch_linear_init(key, fan_in, fan_out):
    """Deterministic init matching nn.Linear's U(-1/sqrt(fan_in), 1/sqrt(fan_in))."""
    kw, kb = jax.random.split(key)
    bound = 1.0 / jnp.sqrt(float(fan_in))
    w = jax.random.uniform(kw, (fan_in, fan_out), jnp.float32, -bound, bound)
    b = jax.random.uniform(kb, (1, fan_out), jnp.float32, -bound, bound)
    return w, b


def make_params(key, input_size, hidden):
    keys = jax.random.split(key, 5)
    eps = 1e-5
    # BatchNorm1d eval-mode with initial running stats (mean=0, var=1, gamma=1, beta=0)
    # folded into per-feature scale/shift.
    bn_scale = jnp.full((1, hidden), 1.0 / jnp.sqrt(1.0 + eps), jnp.float32)
    bn_shift = jnp.zeros((1, hidden), jnp.float32)

    w_phi, b_phi = _torch_linear_init(keys[0], input_size, hidden)
    w_t1, b_t1 = _torch_linear_init(keys[1], hidden, hidden)
    w_t2, b_t2 = _torch_linear_init(keys[2], hidden, 1)
    w_c1, b_c1 = _torch_linear_init(keys[3], hidden, hidden)
    w_c2, b_c2 = _torch_linear_init(keys[4], hidden, 1)

    return dict(
        w_phi=w_phi, b_phi=b_phi, s_phi=bn_scale, t_phi=bn_shift,
        w_t1=w_t1, b_t1=b_t1, s_t1=bn_scale, t_t1=bn_shift,
        w_t2=w_t2, b_t2=b_t2,
        w_c1=w_c1, b_c1=b_c1, s_c1=bn_scale, t_c1=bn_shift,
        w_c2=w_c2, b_c2=b_c2,
    )


def advnet_reference(x, p):
    """Plain-JAX f32 reference (un-fused, un-folded) for correctness checking."""
    phi = jnp.maximum(x @ p["w_phi"] + p["b_phi"], 0.0) * p["s_phi"] + p["t_phi"]
    t = jnp.maximum(phi @ p["w_t1"] + p["b_t1"], 0.0) * p["s_t1"] + p["t_t1"]
    t = jax.nn.sigmoid(t @ p["w_t2"] + p["b_t2"])
    c = jnp.maximum(phi @ p["w_c1"] + p["b_c1"], 0.0) * p["s_c1"] + p["t_c1"]
    c = jax.nn.sigmoid(c @ p["w_c2"] + p["b_c2"])
    return t[:, 0], c[:, 0], phi


if __name__ == "__main__":
    # batch=64, input_size=32, phi_units=head_sizes=adv_units=[128]
    B, D, H = 64, 32, 128

    key = jax.random.PRNGKey(0)
    kx, kp = jax.random.split(key)
    x = jax.random.normal(kx, (B, D), jnp.float32)
    params = make_params(kp, D, H)
    folded = fold_params(params)   # one-time packing/folding, reused across calls

    # Default block_b=4096 -> TB=32 for B=64 (>=2 grid tiles), exercising the pipeline.
    out_task, out_cens, out_phi = advnet_forward(x, folded)
    jax.block_until_ready((out_task, out_cens, out_phi))

    ref_task, ref_cens, ref_phi = advnet_reference(x, params)
    assert out_task.shape == (B,) and out_cens.shape == (B,) and out_phi.shape == (B, H)
    # bf16 matmul operands + bf16 phi output => compare to the f32 reference with a
    # tolerance that still catches any structural error (wrong fusion/column/fold).
    assert jnp.allclose(out_task, ref_task, atol=3e-2)
    assert jnp.allclose(out_cens, ref_cens, atol=3e-2)
    assert jnp.allclose(out_phi.astype(jnp.float32), ref_phi, atol=3e-2)

    # Saturation / finiteness check for extreme logits (tanh-form sigmoid: no exp overflow).
    params_sat = dict(params)
    params_sat["b_t2"] = jnp.full((1, 1), -100.0, jnp.float32)
    params_sat["b_c2"] = jnp.full((1, 1), 100.0, jnp.float32)
    t_sat, c_sat, _ = advnet_forward(x, fold_params(params_sat))
    jax.block_until_ready((t_sat, c_sat))
    assert bool(jnp.all(jnp.isfinite(t_sat))) and bool(jnp.all(jnp.isfinite(c_sat)))
    assert bool(jnp.all(t_sat <= 1e-3)) and bool(jnp.all(c_sat >= 1.0 - 1e-3))

    print("KERNEL_OK")
</pallas_src>

<mosaic_0001>
module attributes {stable_mosaic.version = 11 : i64} {
  func.func @advnet_kernel(%arg0: i32, %arg1: memref<32x32xf32, #tpu.memory_space<vmem>>, %arg2: memref<32x128xbf16, #tpu.memory_space<vmem>>, %arg3: memref<1x128xf32, #tpu.memory_space<vmem>>, %arg4: memref<1x128xf32, #tpu.memory_space<vmem>>, %arg5: memref<1x128xf32, #tpu.memory_space<vmem>>, %arg6: memref<128x256xbf16, #tpu.memory_space<vmem>>, %arg7: memref<1x256xf32, #tpu.memory_space<vmem>>, %arg8: memref<256x2xbf16, #tpu.memory_space<vmem>>, %arg9: memref<1x2xf32, #tpu.memory_space<vmem>>, %arg10: memref<32x2xf32, #tpu.memory_space<vmem>>, %arg11: memref<32x128xbf16, #tpu.memory_space<vmem>>) attributes {dimension_semantics = [#tpu.dimension_semantics<parallel>], iteration_bounds = array<i64: 2>, scalar_prefetch = 0 : i64, scratch_operands = 0 : i64, tpu.core_type = #tpu.core_type<tc>, window_params = [{transform_indices = @transform_0, window_bounds = array<i64: 32, 32>}, {pipeline_mode = #tpu.pipeline_mode<synchronous>, transform_indices = @transform_1, window_bounds = array<i64: 32, 128>}, {pipeline_mode = #tpu.pipeline_mode<synchronous>, transform_indices = @transform_2, window_bounds = array<i64: 1, 128>}, {pipeline_mode = #tpu.pipeline_mode<synchronous>, transform_indices = @transform_3, window_bounds = array<i64: 1, 128>}, {pipeline_mode = #tpu.pipeline_mode<synchronous>, transform_indices = @transform_4, window_bounds = array<i64: 1, 128>}, {pipeline_mode = #tpu.pipeline_mode<synchronous>, transform_indices = @transform_5, window_bounds = array<i64: 128, 256>}, {pipeline_mode = #tpu.pipeline_mode<synchronous>, transform_indices = @transform_6, window_bounds = array<i64: 1, 256>}, {pipeline_mode = #tpu.pipeline_mode<synchronous>, transform_indices = @transform_7, window_bounds = array<i64: 256, 2>}, {pipeline_mode = #tpu.pipeline_mode<synchronous>, transform_indices = @transform_8, window_bounds = array<i64: 1, 2>}, {transform_indices = @transform_9, window_bounds = array<i64: 32, 2>}, {transform_indices = @transform_10, window_bounds = array<i64: 32, 128>}]} {
    %c0 = arith.constant 0 : index
    %c0_0 = arith.constant 0 : index
    %0 = vector.load %arg1[%c0, %c0_0] : memref<32x32xf32, #tpu.memory_space<vmem>>, vector<32x32xf32>
    %1 = arith.truncf %0 : vector<32x32xf32> to vector<32x32xbf16>
    %c0_1 = arith.constant 0 : index
    %c0_2 = arith.constant 0 : index
    %2 = vector.load %arg2[%c0_1, %c0_2] : memref<32x128xbf16, #tpu.memory_space<vmem>>, vector<32x128xbf16>
    %cst = arith.constant dense<0.000000e+00> : vector<32x128xf32>
    %3 = tpu.matmul %1, %2, %cst {dimension_numbers = #tpu.dot_dimension_numbers<[1], [0], [0], [1], [0, 0, 1, 1], [], []>} : vector<32x32xbf16>, vector<32x128xbf16>, vector<32x128xf32> -> vector<32x128xf32>
    %c0_3 = arith.constant 0 : index
    %c0_4 = arith.constant 0 : index
    %4 = vector.load %arg3[%c0_3, %c0_4] : memref<1x128xf32, #tpu.memory_space<vmem>>, vector<1x128xf32>
    %5 = vector.broadcast %4 : vector<1x128xf32> to vector<32x128xf32>
    %6 = arith.addf %3, %5 : vector<32x128xf32>
    %cst_5 = arith.constant 0.000000e+00 : f32
    %7 = vector.broadcast %cst_5 : f32 to vector<32x128xf32>
    %8 = arith.maximumf %6, %7 : vector<32x128xf32>
    %c0_6 = arith.constant 0 : index
    %c0_7 = arith.constant 0 : index
    %9 = vector.load %arg4[%c0_6, %c0_7] : memref<1x128xf32, #tpu.memory_space<vmem>>, vector<1x128xf32>
    %10 = vector.broadcast %9 : vector<1x128xf32> to vector<32x128xf32>
    %11 = arith.mulf %8, %10 : vector<32x128xf32>
    %c0_8 = arith.constant 0 : index
    %c0_9 = arith.constant 0 : index
    %12 = vector.load %arg5[%c0_8, %c0_9] : memref<1x128xf32, #tpu.memory_space<vmem>>, vector<1x128xf32>
    %13 = vector.broadcast %12 : vector<1x128xf32> to vector<32x128xf32>
    %14 = arith.addf %11, %13 : vector<32x128xf32>
    %15 = arith.truncf %14 : vector<32x128xf32> to vector<32x128xbf16>
    %c0_10 = arith.constant 0 : index
    %c0_11 = arith.constant 0 : index
    %16 = vector.load %arg11[%c0_10, %c0_11] : memref<32x128xbf16, #tpu.memory_space<vmem>>, vector<32x128xbf16>
    tpu.vector_store %arg11[%c0_10, %c0_11], %15 {strides = array<i32>} : memref<32x128xbf16, #tpu.memory_space<vmem>>, vector<32x128xbf16>,
    %17 = arith.truncf %14 : vector<32x128xf32> to vector<32x128xbf16>
    %c0_12 = arith.constant 0 : index
    %c0_13 = arith.constant 0 : index
    %18 = vector.load %arg6[%c0_12, %c0_13] : memref<128x256xbf16, #tpu.memory_space<vmem>>, vector<128x256xbf16>
    %cst_14 = arith.constant dense<0.000000e+00> : vector<32x256xf32>
    %19 = tpu.matmul %17, %18, %cst_14 {dimension_numbers = #tpu.dot_dimension_numbers<[1], [0], [0], [1], [0, 0, 1, 1], [], []>} : vector<32x128xbf16>, vector<128x256xbf16>, vector<32x256xf32> -> vector<32x256xf32>
    %c0_15 = arith.constant 0 : index
    %c0_16 = arith.constant 0 : index
    %20 = vector.load %arg7[%c0_15, %c0_16] : memref<1x256xf32, #tpu.memory_space<vmem>>, vector<1x256xf32>
    %21 = vector.broadcast %20 : vector<1x256xf32> to vector<32x256xf32>
    %22 = arith.addf %19, %21 : vector<32x256xf32>
    %cst_17 = arith.constant 0.000000e+00 : f32
    %23 = vector.broadcast %cst_17 : f32 to vector<32x256xf32>
    %24 = arith.maximumf %22, %23 : vector<32x256xf32>
    %25 = arith.truncf %24 : vector<32x256xf32> to vector<32x256xbf16>
    %c0_18 = arith.constant 0 : index
    %c0_19 = arith.constant 0 : index
    %26 = vector.load %arg8[%c0_18, %c0_19] : memref<256x2xbf16, #tpu.memory_space<vmem>>, vector<256x2xbf16>
    %cst_20 = arith.constant dense<0.000000e+00> : vector<32x2xf32>
    %27 = tpu.matmul %25, %26, %cst_20 {dimension_numbers = #tpu.dot_dimension_numbers<[1], [0], [0], [1], [0, 0, 1, 1], [], []>} : vector<32x256xbf16>, vector<256x2xbf16>, vector<32x2xf32> -> vector<32x2xf32>
    %c0_21 = arith.constant 0 : index
    %c0_22 = arith.constant 0 : index
    %28 = vector.load %arg9[%c0_21, %c0_22] : memref<1x2xf32, #tpu.memory_space<vmem>>, vector<1x2xf32>
    %29 = vector.broadcast %28 : vector<1x2xf32> to vector<32x2xf32>
    %30 = arith.addf %27, %29 : vector<32x2xf32>
    %cst_23 = arith.constant 5.000000e-01 : f32
    %31 = vector.broadcast %cst_23 : f32 to vector<32x2xf32>
    %32 = arith.mulf %31, %30 : vector<32x2xf32>
    %33 = math.tanh %32 : vector<32x2xf32>
    %cst_24 = arith.constant 5.000000e-01 : f32
    %34 = vector.broadcast %cst_24 : f32 to vector<32x2xf32>
    %35 = arith.mulf %34, %33 : vector<32x2xf32>
    %cst_25 = arith.constant 5.000000e-01 : f32
    %36 = vector.broadcast %cst_25 : f32 to vector<32x2xf32>
    %37 = arith.addf %35, %36 : vector<32x2xf32>
    %c0_26 = arith.constant 0 : index
    %c0_27 = arith.constant 0 : index
    %38 = vector.load %arg10[%c0_26, %c0_27] : memref<32x2xf32, #tpu.memory_space<vmem>>, vector<32x2xf32>
    tpu.vector_store %arg10[%c0_26, %c0_27], %37 {strides = array<i32>} : memref<32x2xf32, #tpu.memory_space<vmem>>, vector<32x2xf32>,
    return
  }
  func.func @transform_0(%arg0: i32) -> (i32, i32) {
    %c0_i32 = arith.constant 0 : i32
    %c0_i32_0 = arith.constant 0 : i32
    return %arg0, %c0_i32 : i32, i32
  }
  func.func @transform_1(%arg0: i32) -> (i32, i32) {
    %c0_i32 = arith.constant 0 : i32
    %c0_i32_0 = arith.constant 0 : i32
    %c0_i32_1 = arith.constant 0 : i32
    return %c0_i32, %c0_i32_0 : i32, i32
  }
  func.func @transform_2(%arg0: i32) -> (i32, i32) {
    %c0_i32 = arith.constant 0 : i32
    %c0_i32_0 = arith.constant 0 : i32
    %c0_i32_1 = arith.constant 0 : i32
    return %c0_i32, %c0_i32_0 : i32, i32
  }
  func.func @transform_3(%arg0: i32) -> (i32, i32) {
    %c0_i32 = arith.constant 0 : i32
    %c0_i32_0 = arith.constant 0 : i32
    %c0_i32_1 = arith.constant 0 : i32
    return %c0_i32, %c0_i32_0 : i32, i32
  }
  func.func @transform_4(%arg0: i32) -> (i32, i32) {
    %c0_i32 = arith.constant 0 : i32
    %c0_i32_0 = arith.constant 0 : i32
    %c0_i32_1 = arith.constant 0 : i32
    return %c0_i32, %c0_i32_0 : i32, i32
  }
  func.func @transform_5(%arg0: i32) -> (i32, i32) {
    %c0_i32 = arith.constant 0 : i32
    %c0_i32_0 = arith.constant 0 : i32
    %c0_i32_1 = arith.constant 0 : i32
    return %c0_i32, %c0_i32_0 : i32, i32
  }
  func.func @transform_6(%arg0: i32) -> (i32, i32) {
    %c0_i32 = arith.constant 0 : i32
    %c0_i32_0 = arith.constant 0 : i32
    %c0_i32_1 = arith.constant 0 : i32
    return %c0_i32, %c0_i32_0 : i32, i32
  }
  func.func @transform_7(%arg0: i32) -> (i32, i32) {
    %c0_i32 = arith.constant 0 : i32
    %c0_i32_0 = arith.constant 0 : i32
    %c0_i32_1 = arith.constant 0 : i32
    return %c0_i32, %c0_i32_0 : i32, i32
  }
  func.func @transform_8(%arg0: i32) -> (i32, i32) {
    %c0_i32 = arith.constant 0 : i32
    %c0_i32_0 = arith.constant 0 : i32
    %c0_i32_1 = arith.constant 0 : i32
    return %c0_i32, %c0_i32_0 : i32, i32
  }
  func.func @transform_9(%arg0: i32) -> (i32, i32) {
    %c0_i32 = arith.constant 0 : i32
    %c0_i32_0 = arith.constant 0 : i32
    return %arg0, %c0_i32 : i32, i32
  }
  func.func @transform_10(%arg0: i32) -> (i32, i32) {
    %c0_i32 = arith.constant 0 : i32
    %c0_i32_0 = arith.constant 0 : i32
    return %arg0, %c0_i32 : i32, i32
  }
}

</mosaic_0001>

<llo_original>
// kernel: advnet_forward.1
$region0: #{advnet_forward.1}
  #allocation0 [shape = 'u32[]', space=smem, size = 0x4, offset = 0x4, fixed_abs, tag = 'smem constant byte address 0x4 - core index']
  #allocation1 [shape = 'u32[144,128]{1,0:T(1,128)}', space=vmem, size = 0x12000, scoped, tag = 'internal scratch']
  %s0 = inlined_call_operand.vmem [shape: f32[64,32], index: 0, kind: input, shape index: {}]
  %s1 = inlined_call_operand.vmem [shape: bf16[32,128], index: 1, kind: input, shape index: {}]
  %s2 = inlined_call_operand.vmem [shape: f32[1,128], index: 2, kind: input, shape index: {}]
  %s3 = inlined_call_operand.vmem [shape: f32[1,128], index: 3, kind: input, shape index: {}]
  %s4 = inlined_call_operand.vmem [shape: f32[1,128], index: 4, kind: input, shape index: {}]
  %s5 = inlined_call_operand.vmem [shape: bf16[128,256], index: 5, kind: input, shape index: {}]
  %s6 = inlined_call_operand.vmem [shape: f32[1,256], index: 6, kind: input, shape index: {}]
  %s7 = inlined_call_operand.vmem [shape: bf16[256,2], index: 7, kind: input, shape index: {}]
  %s8 = inlined_call_operand.vmem [shape: f32[1,2], index: 8, kind: input, shape index: {}]
  %s9 = inlined_call_operand.vmem [shape: f32[64,2], index: 9, kind: output, shape index: {0}]
  %s10 = inlined_call_operand.hbm [shape: bf16[64,128], index: 10, kind: output, shape index: {1}]
  %11 = xla_tuple %s9, %s10
  %s12 = sld [smem:[#allocation0]]
  $region77: #{advnet_forward.1} parent=0
    _
  %s14 = ssub.s32 1, %s12
  %s15 = scalar_select 0, %s14, %s12
  $region1: #{advnet_forward.1} parent=0
    #allocation2 [shape = 'u8[16384]{0}', space=vmem, size = 0x4000, scoped, tag = 'output window, operand 1']
    #allocation3 [shape = 's32[2]{0}', space=sflag, size = 0x8, scoped, tag = 'scoped memory for advnet_forward.1']
    %16 = vsyncpa [#allocation3], 0
    %s17 = scalar_lea.sflag [#allocation3], 1
    %18 = vsyncpa %s17, 0
    loop: start=0, step=1, limit=4
    $region2: #{advnet_forward.1} parent=1 // loop_pre_header
      _
    $region3: #{advnet_forward.1} parent=1 // loop_header
      %s20 = sphi 0, %s24
      %p21 = scmp.ge.s32.totalorder %s20, 4
      %s30 = sphi 0, %s32
      %s33 = sphi 0, %s30
      %s34 = sphi 0, %s33
      %s50 = sphi 0, %s34
      %s54 = sphi 0, %s54
      %s56 = sphi 0, %s54
      %s57 = sphi 0, %s56
      %s71 = sphi 0, %s57
      %s75 = sphi 0, %s75
      %s77 = sphi 0, %s75
      %s78 = sphi 0, %s77
      %s92 = sphi 0, %s78
      %s96 = sphi 0, %s96
      %s98 = sphi 0, %s96
      %s99 = sphi 0, %s98
      %s113 = sphi 0, %s99
      %s117 = sphi 0, %s117
      %s119 = sphi 0, %s117
      %s120 = sphi 0, %s119
      %s134 = sphi 0, %s120
      %s138 = sphi 0, %s138
      %s140 = sphi 0, %s138
      %s141 = sphi 0, %s140
      %s155 = sphi 0, %s141
      %s159 = sphi 0, %s159
      %s161 = sphi 0, %s159
      %s162 = sphi 0, %s161
      %s176 = sphi 0, %s162
      %s180 = sphi 0, %s180
      %s182 = sphi 0, %s180
      %s183 = sphi 0, %s182
      %s197 = sphi 0, %s183
      %s201 = sphi 0, %s201
      %s203 = sphi 0, %s201
      %s204 = sphi 0, %s203
      %s218 = sphi 0, %s204
      %s224 = sphi 0, %s226
      %s227 = sphi 0, %s224
      %s228 = sphi 0, %s227
      %s244 = sphi 0, %s228
      %s250 = sphi 0, %s252
      %s253 = sphi 0, %s250
      %s254 = sphi 0, %s253
      %s270 = sphi 0, %s254
    $region4: #{advnet_forward.1} parent=1 // loop_header_branch
      %23 = sbr.rel (%p21) target = $region8
    $region5: #{advnet_forward.1} parent=1 // loop_body
      %s25 = ssub.s32 %s20, 1
      %s26 = ssub.s32 %s20, 2
      %s27 = sadd.s32 %s20, 1
      %s28 = ssub.s32 %s20, %s27
      %p29 = scmp.eq.s32.totalorder %s28, 0
      %s31 = sadd.s32 %s30, 1
      %s32 = scalar_select %p29, %s30, %s31
      %p35 = pneg %p29
      %p36 = scmp.eq.s32.totalorder %s20, 1
      %p37 = por %p35, %p36
      %p38 = scmp.ne.s32.totalorder %s30, %s33
      %p39 = scmp.eq.s32.totalorder %s20, 0
      %p40 = por %p38, %p39
      %p41 = scmp.ne.s32.totalorder %s30, %s33
      %p42 = scmp.eq.s32.totalorder %s25, 1
      %p43 = por %p41, %p42
      %p44 = scmp.ne.s32.totalorder %s33, %s34
      %p45 = scmp.eq.s32.totalorder %s25, 0
      %p46 = por %p44, %p45
      %p47 = scmp.ne.s32.totalorder %s33, %s34
      %p48 = scmp.eq.s32.totalorder %s26, 1
      %p49 = por %p47, %p48
      %p51 = scmp.ne.s32.totalorder %s34, %s50
      %p52 = scmp.eq.s32.totalorder %s26, 0
      %p53 = por %p51, %p52
      %s55 = sadd.s32 %s54, 1
      %p58 = scmp.eq.s32.totalorder %s20, 1
      %p59 = scmp.ne.s32.totalorder %s54, %s56
      %p60 = scmp.eq.s32.totalorder %s20, 0
      %p61 = por %p59, %p60
      %p62 = scmp.ne.s32.totalorder %s54, %s56
      %p63 = scmp.eq.s32.totalorder %s25, 1
      %p64 = por %p62, %p63
      %p65 = scmp.ne.s32.totalorder %s56, %s57
      %p66 = scmp.eq.s32.totalorder %s25, 0
      %p67 = por %p65, %p66
      %p68 = scmp.ne.s32.totalorder %s56, %s57
      %p69 = scmp.eq.s32.totalorder %s26, 1
      %p70 = por %p68, %p69
      %p72 = scmp.ne.s32.totalorder %s57, %s71
      %p73 = scmp.eq.s32.totalorder %s26, 0
      %p74 = por %p72, %p73
      %s76 = sadd.s32 %s75, 1
      %p79 = scmp.eq.s32.totalorder %s20, 1
      %p80 = scmp.ne.s32.totalorder %s75, %s77
      %p81 = scmp.eq.s32.totalorder %s20, 0
      %p82 = por %p80, %p81
      %p83 = scmp.ne.s32.totalorder %s75, %s77
      %p84 = scmp.eq.s32.totalorder %s25, 1
      %p85 = por %p83, %p84
      %p86 = scmp.ne.s32.totalorder %s77, %s78
      %p87 = scmp.eq.s32.totalorder %s25, 0
      %p88 = por %p86, %p87
      %p89 = scmp.ne.s32.totalorder %s77, %s78
      %p90 = scmp.eq.s32.totalorder %s26, 1
      %p91 = por %p89, %p90
      %p93 = scmp.ne.s32.totalorder %s78, %s92
      %p94 = scmp.eq.s32.totalorder %s26, 0
      %p95 = por %p93, %p94
      %s97 = sadd.s32 %s96, 1
      %p100 = scmp.eq.s32.totalorder %s20, 1
      %p101 = scmp.ne.s32.totalorder %s96, %s98
      %p102 = scmp.eq.s32.totalorder %s20, 0
      %p103 = por %p101, %p102
      %p104 = scmp.ne.s32.totalorder %s96, %s98
      %p105 = scmp.eq.s32.totalorder %s25, 1
      %p106 = por %p104, %p105
      %p107 = scmp.ne.s32.totalorder %s98, %s99
      %p108 = scmp.eq.s32.totalorder %s25, 0
      %p109 = por %p107, %p108
      %p110 = scmp.ne.s32.totalorder %s98, %s99
      %p111 = scmp.eq.s32.totalorder %s26, 1
      %p112 = por %p110, %p111
      %p114 = scmp.ne.s32.totalorder %s99, %s113
      %p115 = scmp.eq.s32.totalorder %s26, 0
      %p116 = por %p114, %p115
      %s118 = sadd.s32 %s117, 1
      %p121 = scmp.eq.s32.totalorder %s20, 1
      %p122 = scmp.ne.s32.totalorder %s117, %s119
      %p123 = scmp.eq.s32.totalorder %s20, 0
      %p124 = por %p122, %p123
      %p125 = scmp.ne.s32.totalorder %s117, %s119
      %p126 = scmp.eq.s32.totalorder %s25, 1
      %p127 = por %p125, %p126
      %p128 = scmp.ne.s32.totalorder %s119, %s120
      %p129 = scmp.eq.s32.totalorder %s25, 0
      %p130 = por %p128, %p129
      %p131 = scmp.ne.s32.totalorder %s119, %s120
      %p132 = scmp.eq.s32.totalorder %s26, 1
      %p133 = por %p131, %p132
      %p135 = scmp.ne.s32.totalorder %s120, %s134
      %p136 = scmp.eq.s32.totalorder %s26, 0
      %p137 = por %p135, %p136
      %s139 = sadd.s32 %s138, 1
      %p142 = scmp.eq.s32.totalorder %s20, 1
      %p143 = scmp.ne.s32.totalorder %s138, %s140
      %p144 = scmp.eq.s32.totalorder %s20, 0
      %p145 = por %p143, %p144
      %p146 = scmp.ne.s32.totalorder %s138, %s140
      %p147 = scmp.eq.s32.totalorder %s25, 1
      %p148 = por %p146, %p147
      %p149 = scmp.ne.s32.totalorder %s140, %s141
      %p150 = scmp.eq.s32.totalorder %s25, 0
      %p151 = por %p149, %p150
      %p152 = scmp.ne.s32.totalorder %s140, %s141
      %p153 = scmp.eq.s32.totalorder %s26, 1
      %p154 = por %p152, %p153
      %p156 = scmp.ne.s32.totalorder %s141, %s155
      %p157 = scmp.eq.s32.totalorder %s26, 0
      %p158 = por %p156, %p157
      %s160 = sadd.s32 %s159, 1
      %p163 = scmp.eq.s32.totalorder %s20, 1
      %p164 = scmp.ne.s32.totalorder %s159, %s161
      %p165 = scmp.eq.s32.totalorder %s20, 0
      %p166 = por %p164, %p165
      %p167 = scmp.ne.s32.totalorder %s159, %s161
      %p168 = scmp.eq.s32.totalorder %s25, 1
      %p169 = por %p167, %p168
      %p170 = scmp.ne.s32.totalorder %s161, %s162
      %p171 = scmp.eq.s32.totalorder %s25, 0
      %p172 = por %p170, %p171
      %p173 = scmp.ne.s32.totalorder %s161, %s162
      %p174 = scmp.eq.s32.totalorder %s26, 1
      %p175 = por %p173, %p174
      %p177 = scmp.ne.s32.totalorder %s162, %s176
      %p178 = scmp.eq.s32.totalorder %s26, 0
      %p179 = por %p177, %p178
      %s181 = sadd.s32 %s180, 1
      %p184 = scmp.eq.s32.totalorder %s20, 1
      %p185 = scmp.ne.s32.totalorder %s180, %s182
      %p186 = scmp.eq.s32.totalorder %s20, 0
      %p187 = por %p185, %p186
      %p188 = scmp.ne.s32.totalorder %s180, %s182
      %p189 = scmp.eq.s32.totalorder %s25, 1
      %p190 = por %p188, %p189
      %p191 = scmp.ne.s32.totalorder %s182, %s183
      %p192 = scmp.eq.s32.totalorder %s25, 0
      %p193 = por %p191, %p192
      %p194 = scmp.ne.s32.totalorder %s182, %s183
      %p195 = scmp.eq.s32.totalorder %s26, 1
      %p196 = por %p194, %p195
      %p198 = scmp.ne.s32.totalorder %s183, %s197
      %p199 = scmp.eq.s32.totalorder %s26, 0
      %p200 = por %p198, %p199
      %s202 = sadd.s32 %s201, 1
      %p205 = scmp.eq.s32.totalorder %s20, 1
      %p206 = scmp.ne.s32.totalorder %s201, %s203
      %p207 = scmp.eq.s32.totalorder %s20, 0
      %p208 = por %p206, %p207
      %p209 = scmp.ne.s32.totalorder %s201, %s203
      %p210 = scmp.eq.s32.totalorder %s25, 1
      %p211 = por %p209, %p210
      %p212 = scmp.ne.s32.totalorder %s203, %s204
      %p213 = scmp.eq.s32.totalorder %s25, 0
      %p214 = por %p212, %p213
      %p215 = scmp.ne.s32.totalorder %s203, %s204
      %p216 = scmp.eq.s32.totalorder %s26, 1
      %p217 = por %p215, %p216
      %p219 = scmp.ne.s32.totalorder %s204, %s218
      %p220 = scmp.eq.s32.totalorder %s26, 0
      %p221 = por %p219, %p220
      %s222 = ssub.s32 %s20, %s27
      %p223 = scmp.eq.s32.totalorder %s222, 0
      %s225 = sadd.s32 %s224, 1
      %s226 = scalar_select %p223, %s224, %s225
      %p229 = pneg %p223
      %p230 = scmp.eq.s32.totalorder %s20, 1
      %p231 = por %p229, %p230
      %p232 = scmp.ne.s32.totalorder %s224, %s227
      %p233 = scmp.eq.s32.totalorder %s20, 0
      %p234 = por %p232, %p233
      %p235 = scmp.ne.s32.totalorder %s224, %s227
      %p236 = scmp.eq.s32.totalorder %s25, 1
      %p237 = por %p235, %p236
      %p238 = scmp.ne.s32.totalorder %s227, %s228
      %p239 = scmp.eq.s32.totalorder %s25, 0
      %p240 = por %p238, %p239
      %p241 = scmp.ne.s32.totalorder %s227, %s228
      %p242 = scmp.eq.s32.totalorder %s26, 1
      %p243 = por %p241, %p242
      %p245 = scmp.ne.s32.totalorder %s228, %s244
      %p246 = scmp.eq.s32.totalorder %s26, 0
      %p247 = por %p245, %p246
      %s248 = ssub.s32 %s20, %s27
      %p249 = scmp.eq.s32.totalorder %s248, 0
      %s251 = sadd.s32 %s250, 1
      %s252 = scalar_select %p249, %s250, %s251
      %p255 = pneg %p249
      %p256 = scmp.eq.s32.totalorder %s20, 1
      %p257 = por %p255, %p256
      %p258 = scmp.ne.s32.totalorder %s250, %s253
      %p259 = scmp.eq.s32.totalorder %s20, 0
      %p260 = por %p258, %p259
      %p261 = scmp.ne.s32.totalorder %s250, %s253
      %p262 = scmp.eq.s32.totalorder %s25, 1
      %p263 = por %p261, %p262
      %p264 = scmp.ne.s32.totalorder %s253, %s254
      %p265 = scmp.eq.s32.totalorder %s25, 0
      %p266 = por %p264, %p265
      %p267 = scmp.ne.s32.totalorder %s253, %s254
      %p268 = scmp.eq.s32.totalorder %s26, 1
      %p269 = por %p267, %p268
      %p271 = scmp.ne.s32.totalorder %s254, %s270
      %p272 = scmp.eq.s32.totalorder %s26, 0
      %p273 = por %p271, %p272
      %p274 = scmp.le.s32.totalorder 1, %s20
      %p275 = scmp.lt.s32.totalorder %s20, 3
      %p276 = pnand %p274, %p275
      %p277 = pneg %p276
      // Predicated region
      $region9: #{advnet_forward.1} parent=5 // pred_check
        _
      $region10: #{advnet_forward.1} parent=5 // pred_check_branch
        %279 = sbr.rel (%p276) target = $region12
      $region11: #{advnet_forward.1} parent=5 // pred_region
        %s280 = ssub.s32 %s20, 1
        // Predicated region
        $region13: #{advnet_forward.1} parent=11 // pred_check
          %p281 = pneg %p67
        $region14: #{advnet_forward.1} parent=11 // pred_check_branch
          %283 = sbr.rel (%p281) target = $region16
        $region15: #{advnet_forward.1} parent=11 // pred_region
          _
        $region16: #{advnet_forward.1} parent=11 // pred_fallthru
          _
        // Predicated region
        $region17: #{advnet_forward.1} parent=11 // pred_check
          %p284 = pneg %p88
        $region18: #{advnet_forward.1} parent=11 // pred_check_branch
          %286 = sbr.rel (%p284) target = $region20
        $region19: #{advnet_forward.1} parent=11 // pred_region
          _
        $region20: #{advnet_forward.1} parent=11 // pred_fallthru
          _
        // Predicated region
        $region21: #{advnet_forward.1} parent=11 // pred_check
          %p287 = pneg %p109
        $region22: #{advnet_forward.1} parent=11 // pred_check_branch
          %289 = sbr.rel (%p287) target = $region24
        $region23: #{advnet_forward.1} parent=11 // pred_region
          _
        $region24: #{advnet_forward.1} parent=11 // pred_fallthru
          _
        // Predicated region
        $region25: #{advnet_forward.1} parent=11 // pred_check
          %p290 = pneg %p130
        $region26: #{advnet_forward.1} parent=11 // pred_check_branch
          %292 = sbr.rel (%p290) target = $region28
        $region27: #{advnet_forward.1} parent=11 // pred_region
          _
        $region28: #{advnet_forward.1} parent=11 // pred_fallthru
          _
        // Predicated region
        $region29: #{advnet_forward.1} parent=11 // pred_check
          %p293 = pneg %p151
        $region30: #{advnet_forward.1} parent=11 // pred_check_branch
          %295 = sbr.rel (%p293) target = $region32
        $region31: #{advnet_forward.1} parent=11 // pred_region
          _
        $region32: #{advnet_forward.1} parent=11 // pred_fallthru
          _
        // Predicated region
        $region33: #{advnet_forward.1} parent=11 // pred_check
          %p296 = pneg %p172
        $region34: #{advnet_forward.1} parent=11 // pred_check_branch
          %298 = sbr.rel (%p296) target = $region36
        $region35: #{advnet_forward.1} parent=11 // pred_region
          _
        $region36: #{advnet_forward.1} parent=11 // pred_fallthru
          _
        // Predicated region
        $region37: #{advnet_forward.1} parent=11 // pred_check
          %p299 = pneg %p193
        $region38: #{advnet_forward.1} parent=11 // pred_check_branch
          %301 = sbr.rel (%p299) target = $region40
        $region39: #{advnet_forward.1} parent=11 // pred_region
          _
        $region40: #{advnet_forward.1} parent=11 // pred_fallthru
          _
        // Predicated region
        $region41: #{advnet_forward.1} parent=11 // pred_check
          %p302 = pneg %p214
        $region42: #{advnet_forward.1} parent=11 // pred_check_branch
          %304 = sbr.rel (%p302) target = $region44
        $region43: #{advnet_forward.1} parent=11 // pred_region
          _
        $region44: #{advnet_forward.1} parent=11 // pred_fallthru
          _
      $region12: #{advnet_forward.1} parent=5 // pred_fallthru
        _
      %p305 = scmp.lt.s32.totalorder %s20, 2
      // Predicated region
      $region45: #{advnet_forward.1} parent=5 // pred_check
        %p306 = pneg %p305
      $region46: #{advnet_forward.1} parent=5 // pred_check_branch
        %308 = sbr.rel (%p306) target = $region48
      $region47: #{advnet_forward.1} parent=5 // pred_region
        // Predicated region
        $region49: #{advnet_forward.1} parent=47 // pred_check
          %p309 = pneg %p40
        $region50: #{advnet_forward.1} parent=47 // pred_check_branch
          %311 = sbr.rel (%p309) target = $region52
        $region51: #{advnet_forward.1} parent=47 // pred_region
          %s312 = smul.u32 4, %s20
          %p313 = scmp.lt.s32.totalorder %s312, 7
          %s314 = scalar_select %p313, %s312, 7
          %s315 = smul.addr %s314, 8
          %s316 = scalar_lea.vmem %s0, %s315
          %s317 = smul.u32 4, %s20
        $region52: #{advnet_forward.1} parent=47 // pred_fallthru
          _
      $region48: #{advnet_forward.1} parent=5 // pred_fallthru
        _
      %p318 = scmp.le.s32.totalorder 1, %s20
      %p319 = scmp.lt.s32.totalorder %s20, 3
      %p320 = pnand %p318, %p319
      %p321 = pneg %p320
      // Predicated region
      $region53: #{advnet_forward.1} parent=5 // pred_check
        _
      $region54: #{advnet_forward.1} parent=5 // pred_check_branch
        %323 = sbr.rel (%p320) target = $region56
      $region55: #{advnet_forward.1} parent=5 // pred_region
        %s324 = ssub.s32 %s20, 1
        %s325 = smul.u32 4, %s25
        %p326 = scmp.lt.s32.totalorder %s325, 7
        %s327 = scalar_select %p326, %s325, 7
        %s328 = smul.addr %s327, 8
        %s329 = scalar_lea.vmem %s0, %s328
        %p330 = pneg %p46
        %p331 = pneg %p43
        %p332 = pneg %p67
        %p333 = pneg %p64
        %p334 = pneg %p88
        %p335 = pneg %p85
        %p336 = pneg %p109
        %p337 = pneg %p106
        %p338 = pneg %p130
        %p339 = pneg %p127
        %p340 = pneg %p151
        %p341 = pneg %p148
        %p342 = pneg %p172
        %p343 = pneg %p169
        %p344 = pneg %p193
        %p345 = pneg %p190
        %p346 = pneg %p214
        %p347 = pneg %p211
        %p348 = pneg %p240
        %p349 = pneg %p237
        %s350 = smul.u32 4, %s25
        %p351 = scmp.lt.s32.totalorder %s350, 7
        %s352 = scalar_select %p351, %s350, 7
        %s353 = smul.addr %s352, 8
        %s354 = scalar_lea.vmem %s9, %s353
        %p355 = pneg %p266
        %p356 = pneg %p263
        %s357 = sand.u32 %s253, 1
        %s358 = scalar_lea.sflag [#allocation3], %s357
        %s359 = sand.u32 %s253, 1
        %s360 = smul.addr %s359, 16
        %s361 = scalar_lea.vmem [#allocation2], %s360
        %s362 = smul.u32 4, %s25
        %p363 = scmp.lt.s32.totalorder %s362, 7
        %s364 = scalar_select %p363, %s362, 7
        %s365 = smul.addr %s364, 8
        %s366 = scalar_lea.vmem %s0, %s365
        %s367 = smul.u32 4, %s25
        %s368 = smul.u32 4, %s25
        %p369 = scmp.lt.s32.totalorder %s368, 7
        %s370 = scalar_select %p369, %s368, 7
        %s371 = smul.addr %s370, 8
        %s372 = scalar_lea.vmem %s9, %s371
        %s373 = smul.u32 4, %s25
        %s374 = smul.u32 4, %s25
        %v376 = vld [vmem:[%s366] sm:$0xff]
        %v377 = vld [vmem:[%s366 + $0x8] sm:$0xff]
        %v378 = vld [vmem:[%s366 + $0x10] sm:$0xff]
        %v379 = vld [vmem:[%s366 + $0x18] sm:$0xff]
        %v380 = vpack.c.bf16 %v377, %v376
        %v381 = vpack.c.bf16 %v379, %v378
        %v382 = vld [vmem:[%s1] sm:$0xf]
        %v383 = vld [vmem:[%s1 + $0x4] sm:$0xf]
        %v384 = vld [vmem:[%s1 + $0x8] sm:$0xf]
        %v385 = vld [vmem:[%s1 + $0xc] sm:$0xf]
        %v386 = vld [vmem:[%s2] sm:$0x1]
        %v388 = vlaneseq
        %v389 = vshrl.u32 %v388, 7
        %v390 = vsub.s32 0, %v389
        %v391 = vrot.slane %v386, %v390
        %v397 = vunpack.c.l.b16 %v382
        %v398 = vunpack.c.l.b16 %v383
        %v399 = vunpack.c.l.b16 %v384
        %v400 = vunpack.c.l.b16 %v385
        %v401 = vpack.c.b16 %v398, %v397
        %v402 = vpack.c.b16 %v400, %v399
        %vm405 = vcmask 261120
        %v407 = vsel %vm405, %v380, 0
        %v410 = vsel %vm405, %v381, 0
        %412 = vmatprep.subr.bf16.mxu0 0
        %413 = vmatpush1.bf16.msra.mxu0 %v401
        %414 = vmatprep.subr.bf16.mxu0 0
        %415 = vmatpush1.bf16.msra.mxu0 %v402
        %416 = vmatprep.subr.bf16.mxu0 0
        %417 = vmatpush1.bf16.msra.mxu0 0
        %418 = vmatprep.subr.bf16.mxu0 0
        %419 = vmatpush1.bf16.msra.mxu0 0
        %420 = vmatprep.subr.bf16.mxu0 0
        %421 = vmatpush1.bf16.msra.mxu0 0
        %422 = vmatprep.subr.bf16.mxu0 0
        %423 = vmatpush1.bf16.msra.mxu0 0
        %424 = vmatprep.subr.bf16.mxu0 0
        %425 = vmatpush1.bf16.msra.mxu0 0
        %426 = vmatprep.subr.bf16.mxu0 0
        %427 = vmatpush1.bf16.msra.mxu0 0
        %428 = vmatprep.subr.bf16.mxu0 0
        %429 = vmatpush1.bf16.msra.mxu0 0
        %430 = vmatprep.subr.bf16.mxu0 0
        %431 = vmatpush1.bf16.msra.mxu0 0
        %432 = vmatprep.subr.bf16.mxu0 0
        %433 = vmatpush1.bf16.msra.mxu0 0
        %434 = vmatprep.subr.bf16.mxu0 0
        %435 = vmatpush1.bf16.msra.mxu0 0
        %436 = vmatprep.subr.bf16.mxu0 0
        %437 = vmatpush1.bf16.msra.mxu0 0
        %438 = vmatprep.subr.bf16.mxu0 0
        %439 = vmatpush1.bf16.msra.mxu0 0
        %440 = vmatprep.subr.bf16.mxu0 0
        %441 = vmatpush1.bf16.msra.mxu0 0
        %442 = vmatprep.subr.bf16.mxu0 0
        %443 = vmatpush1.bf16.msra.mxu0 0
        %444 = vmatprep.mubr.bf16.mxu0 0
        %445 = vmatmul.mubr.bf16.gmra.mrb[0].mxu0 %v407
        %v446 = vpop.f32.mrb[0].mxu0
        %v447 = vadd.f32 %v391, %v446
        %v448 = vpop.f32.mrb[0].mxu0
        %v449 = vpop.f32.mrb[0].mxu0
        %v450 = vadd.f32 %v391, %v449
        %v451 = vpop.f32.mrb[0].mxu0
        %452 = vmatprep.mubr.bf16.mxu0 0
        %453 = vmatmul.mubr.bf16.gmra.mrb[0].mxu0 %v410
        %v454 = vpop.f32.mrb[0].mxu0
        %v455 = vadd.f32 %v391, %v454
        %v456 = vpop.f32.mrb[0].mxu0
        %v457 = vpop.f32.mrb[0].mxu0
        %v458 = vadd.f32 %v391, %v457
        %v459 = vpop.f32.mrb[0].mxu0
        %460 = vdwg.mxu0
        %v461 = vmax.f32 %v447, 0.0
        %v462 = vmax.f32 %v450, 0.0
        %v463 = vmax.f32 %v455, 0.0
        %v464 = vmax.f32 %v458, 0.0
        %v465 = vld [vmem:[%s3] sm:$0x1]
        %v467 = vlaneseq
        %v468 = vshrl.u32 %v467, 7
        %v469 = vsub.s32 0, %v468
        %v470 = vrot.slane %v465, %v469
        %v472 = vmul.f32 %v461, %v470
        %v473 = vmul.f32 %v462, %v470
        %v474 = vmul.f32 %v463, %v470
        %v475 = vmul.f32 %v464, %v470
        %v476 = vld [vmem:[%s4] sm:$0x1]
        %v478 = vlaneseq
        %v479 = vshrl.u32 %v478, 7
        %v480 = vsub.s32 0, %v479
        %v481 = vrot.slane %v476, %v480
        %v483 = vadd.f32 %v472, %v481
        %v484 = vadd.f32 %v473, %v481
        %v485 = vadd.f32 %v474, %v481
        %v486 = vadd.f32 %v475, %v481
        %v487 = vpack.c.bf16 %v484, %v483
        %v488 = vpack.c.bf16 %v486, %v485
        %v491 = vunpack.c.l.b16 %v487
        %v492 = vunpack.c.h.b16 %v487
        %v493 = vunpack.c.l.b16 %v488
        %v494 = vunpack.c.h.b16 %v488
        %v495 = vpack.c.b16 %v491, %v491
        %v496 = vpack.c.b16 %v492, %v492
        %v497 = vpack.c.b16 %v493, %v493
        %v498 = vpack.c.b16 %v494, %v494
        %503 = vst [vmem:[%s361] sm:$0xf] %v495
        %504 = vst [vmem:[%s361 + $0x4] sm:$0xf] %v496
        %505 = vst [vmem:[%s361 + $0x8] sm:$0xf] %v497
        %506 = vst [vmem:[%s361 + $0xc] sm:$0xf] %v498
        %v507 = vld [vmem:[%s5] sm:$0xff]
        %v508 = vld [vmem:[%s5 + $0x8] sm:$0xff]
        %v509 = vld [vmem:[%s5 + $0x10] sm:$0xff]
        %v510 = vld [vmem:[%s5 + $0x18] sm:$0xff]
        %v511 = vld [vmem:[%s5 + $0x20] sm:$0xff]
        %v512 = vld [vmem:[%s5 + $0x28] sm:$0xff]
        %v513 = vld [vmem:[%s5 + $0x30] sm:$0xff]
        %v514 = vld [vmem:[%s5 + $0x38] sm:$0xff]
        %v515 = vld [vmem:[%s5 + $0x40] sm:$0xff]
        %v516 = vld [vmem:[%s5 + $0x48] sm:$0xff]
        %v517 = vld [vmem:[%s5 + $0x50] sm:$0xff]
        %v518 = vld [vmem:[%s5 + $0x58] sm:$0xff]
        %v519 = vld [vmem:[%s5 + $0x60] sm:$0xff]
        %v520 = vld [vmem:[%s5 + $0x68] sm:$0xff]
        %v521 = vld [vmem:[%s5 + $0x70] sm:$0xff]
        %v522 = vld [vmem:[%s5 + $0x78] sm:$0xff]
        %v523 = vld [vmem:[%s6] sm:$0x3]
        %v525 = vlaneseq
        %v526 = vshrl.u32 %v525, 7
        %v527 = vsub.s32 0, %v526
        %v528 = vrot.slane %v523, %v527
        %v529 = vlaneseq
        %v530 = vshrl.u32 %v529, 7
        %v531 = vsub.s32 1, %v530
        %v532 = vrot.slane %v523, %v531
        %v551 = vunpack.c.l.b16 %v507
        %v552 = vunpack.c.h.b16 %v507
        %v553 = vunpack.c.l.b16 %v508
        %v554 = vunpack.c.h.b16 %v508
        %v555 = vunpack.c.l.b16 %v509
        %v556 = vunpack.c.h.b16 %v509
        %v557 = vunpack.c.l.b16 %v510
        %v558 = vunpack.c.h.b16 %v510
        %v559 = vunpack.c.l.b16 %v511
        %v560 = vunpack.c.h.b16 %v511
        %v561 = vunpack.c.l.b16 %v512
        %v562 = vunpack.c.h.b16 %v512
        %v563 = vunpack.c.l.b16 %v513
        %v564 = vunpack.c.h.b16 %v513
        %v565 = vunpack.c.l.b16 %v514
        %v566 = vunpack.c.h.b16 %v514
        %v567 = vunpack.c.l.b16 %v515
        %v568 = vunpack.c.h.b16 %v515
        %v569 = vunpack.c.l.b16 %v516
        %v570 = vunpack.c.h.b16 %v516
        %v571 = vunpack.c.l.b16 %v517
        %v572 = vunpack.c.h.b16 %v517
        %v573 = vunpack.c.l.b16 %v518
        %v574 = vunpack.c.h.b16 %v518
        %v575 = vunpack.c.l.b16 %v519
        %v576 = vunpack.c.h.b16 %v519
        %v577 = vunpack.c.l.b16 %v520
        %v578 = vunpack.c.h.b16 %v520
        %v579 = vunpack.c.l.b16 %v521
        %v580 = vunpack.c.h.b16 %v521
        %v581 = vunpack.c.l.b16 %v522
        %v582 = vunpack.c.h.b16 %v522
        %v583 = vpack.c.b16 %v553, %v551
        %v584 = vpack.c.b16 %v554, %v552
        %v585 = vpack.c.b16 %v557, %v555
        %v586 = vpack.c.b16 %v558, %v556
        %v587 = vpack.c.b16 %v561, %v559
        %v588 = vpack.c.b16 %v562, %v560
        %v589 = vpack.c.b16 %v565, %v563
        %v590 = vpack.c.b16 %v566, %v564
        %v591 = vpack.c.b16 %v569, %v567
        %v592 = vpack.c.b16 %v570, %v568
        %v593 = vpack.c.b16 %v573, %v571
        %v594 = vpack.c.b16 %v574, %v572
        %v595 = vpack.c.b16 %v577, %v575
        %v596 = vpack.c.b16 %v578, %v576
        %v597 = vpack.c.b16 %v581, %v579
        %v598 = vpack.c.b16 %v582, %v580
        %615 = vmatprep.subr.bf16.mxu0 %v584
        %616 = vmatpush1.bf16.msra.mxu0 %v583
        %617 = vmatprep.subr.bf16.mxu0 %v586
        %618 = vmatpush1.bf16.msra.mxu0 %v585
        %619 = vmatprep.subr.bf16.mxu0 %v588
        %620 = vmatpush1.bf16.msra.mxu0 %v587
        %621 = vmatprep.subr.bf16.mxu0 %v590
        %622 = vmatpush1.bf16.msra.mxu0 %v589
        %623 = vmatprep.subr.bf16.mxu0 %v592
        %624 = vmatpush1.bf16.msra.mxu0 %v591
        %625 = vmatprep.subr.bf16.mxu0 %v594
        %626 = vmatpush1.bf16.msra.mxu0 %v593
        %627 = vmatprep.subr.bf16.mxu0 %v596
        %628 = vmatpush1.bf16.msra.mxu0 %v595
        %629 = vmatprep.subr.bf16.mxu0 %v598
        %630 = vmatpush1.bf16.msra.mxu0 %v597
        %631 = vmatprep.subr.bf16.mxu0 0
        %632 = vmatpush1.bf16.msra.mxu0 0
        %633 = vmatprep.subr.bf16.mxu0 0
        %634 = vmatpush1.bf16.msra.mxu0 0
        %635 = vmatprep.subr.bf16.mxu0 0
        %636 = vmatpush1.bf16.msra.mxu0 0
        %637 = vmatprep.subr.bf16.mxu0 0
        %638 = vmatpush1.bf16.msra.mxu0 0
        %639 = vmatprep.subr.bf16.mxu0 0
        %640 = vmatpush1.bf16.msra.mxu0 0
        %641 = vmatprep.subr.bf16.mxu0 0
        %642 = vmatpush1.bf16.msra.mxu0 0
        %643 = vmatprep.subr.bf16.mxu0 0
        %644 = vmatpush1.bf16.msra.mxu0 0
        %645 = vmatprep.subr.bf16.mxu0 0
        %646 = vmatpush1.bf16.msra.mxu0 0
        %647 = vmatprep.mubr.bf16.mxu0 0
        %648 = vmatmul.mubr.bf16.gmra.mrb[0].mxu0 %v487
        %v649 = vpop.f32.mrb[0].mxu0
        %v650 = vadd.f32 %v528, %v649
        %v651 = vpop.f32.mrb[0].mxu0
        %v652 = vadd.f32 %v532, %v651
        %v653 = vpop.f32.mrb[0].mxu0
        %v654 = vadd.f32 %v528, %v653
        %v655 = vpop.f32.mrb[0].mxu0
        %v656 = vadd.f32 %v532, %v655
        %657 = vmatprep.mubr.bf16.mxu0 0
        %658 = vmatmul.mubr.bf16.gmra.mrb[0].mxu0 %v488
        %v659 = vpop.f32.mrb[0].mxu0
        %v660 = vadd.f32 %v528, %v659
        %v661 = vpop.f32.mrb[0].mxu0
        %v662 = vadd.f32 %v532, %v661
        %v663 = vpop.f32.mrb[0].mxu0
        %v664 = vadd.f32 %v528, %v663
        %v665 = vpop.f32.mrb[0].mxu0
        %v666 = vadd.f32 %v532, %v665
        %667 = vdwg.mxu0
        %v668 = vmax.f32 %v650, 0.0
        %v669 = vmax.f32 %v652, 0.0
        %v670 = vmax.f32 %v654, 0.0
        %v671 = vmax.f32 %v656, 0.0
        %v672 = vmax.f32 %v660, 0.0
        %v673 = vmax.f32 %v662, 0.0
        %v674 = vmax.f32 %v664, 0.0
        %v675 = vmax.f32 %v666, 0.0
        %v676 = vpack.c.bf16 %v670, %v668
        %v677 = vpack.c.bf16 %v671, %v669
        %v678 = vpack.c.bf16 %v674, %v672
        %v679 = vpack.c.bf16 %v675, %v673
        %v680 = vld [vmem:[%s7] sm:$0xf]
        %v681 = vld [vmem:[%s7 + $0x4] sm:$0xf]
        %v682 = vld [vmem:[%s7 + $0x8] sm:$0xf]
        %v683 = vld [vmem:[%s7 + $0xc] sm:$0xf]
        %v684 = vld [vmem:[%s7 + $0x10] sm:$0xf]
        %v685 = vld [vmem:[%s7 + $0x14] sm:$0xf]
        %v686 = vld [vmem:[%s7 + $0x18] sm:$0xf]
        %v687 = vld [vmem:[%s7 + $0x1c] sm:$0xf]
        %v688 = vld [vmem:[%s7 + $0x20] sm:$0xf]
        %v689 = vld [vmem:[%s7 + $0x24] sm:$0xf]
        %v690 = vld [vmem:[%s7 + $0x28] sm:$0xf]
        %v691 = vld [vmem:[%s7 + $0x2c] sm:$0xf]
        %v692 = vld [vmem:[%s7 + $0x30] sm:$0xf]
        %v693 = vld [vmem:[%s7 + $0x34] sm:$0xf]
        %v694 = vld [vmem:[%s7 + $0x38] sm:$0xf]
        %v695 = vld [vmem:[%s7 + $0x3c] sm:$0xf]
        %v696 = vld [vmem:[%s7 + $0x40] sm:$0xf]
        %v697 = vld [vmem:[%s7 + $0x44] sm:$0xf]
        %v698 = vld [vmem:[%s7 + $0x48] sm:$0xf]
        %v699 = vld [vmem:[%s7 + $0x4c] sm:$0xf]
        %v700 = vld [vmem:[%s7 + $0x50] sm:$0xf]
        %v701 = vld [vmem:[%s7 + $0x54] sm:$0xf]
        %v702 = vld [vmem:[%s7 + $0x58] sm:$0xf]
        %v703 = vld [vmem:[%s7 + $0x5c] sm:$0xf]
        %v704 = vld [vmem:[%s7 + $0x60] sm:$0xf]
        %v705 = vld [vmem:[%s7 + $0x64] sm:$0xf]
        %v706 = vld [vmem:[%s7 + $0x68] sm:$0xf]
        %v707 = vld [vmem:[%s7 + $0x6c] sm:$0xf]
        %v708 = vld [vmem:[%s7 + $0x70] sm:$0xf]
        %v709 = vld [vmem:[%s7 + $0x74] sm:$0xf]
        %v710 = vld [vmem:[%s7 + $0x78] sm:$0xf]
        %v711 = vld [vmem:[%s7 + $0x7c] sm:$0xf]
        %v712 = vld [vmem:[%s8] sm:$0x1]
        %v714 = vlaneseq
        %v715 = vshrl.u32 %v714, 7
        %v716 = vsub.s32 0, %v715
        %v717 = vrot.slane %v712, %v716
        %v751 = vunpack.c.l.b16 %v680
        %v752 = vunpack.c.l.b16 %v681
        %v753 = vunpack.c.l.b16 %v682
        %v754 = vunpack.c.l.b16 %v683
        %v755 = vunpack.c.l.b16 %v684
        %v756 = vunpack.c.l.b16 %v685
        %v757 = vunpack.c.l.b16 %v686
        %v758 = vunpack.c.l.b16 %v687
        %v759 = vunpack.c.l.b16 %v688
        %v760 = vunpack.c.l.b16 %v689
        %v761 = vunpack.c.l.b16 %v690
        %v762 = vunpack.c.l.b16 %v691
        %v763 = vunpack.c.l.b16 %v692
        %v764 = vunpack.c.l.b16 %v693
        %v765 = vunpack.c.l.b16 %v694
        %v766 = vunpack.c.l.b16 %v695
        %v767 = vunpack.c.l.b16 %v696
        %v768 = vunpack.c.l.b16 %v697
        %v769 = vunpack.c.l.b16 %v698
        %v770 = vunpack.c.l.b16 %v699
        %v771 = vunpack.c.l.b16 %v700
        %v772 = vunpack.c.l.b16 %v701
        %v773 = vunpack.c.l.b16 %v702
        %v774 = vunpack.c.l.b16 %v703
        %v775 = vunpack.c.l.b16 %v704
        %v776 = vunpack.c.l.b16 %v705
        %v777 = vunpack.c.l.b16 %v706
        %v778 = vunpack.c.l.b16 %v707
        %v779 = vunpack.c.l.b16 %v708
        %v780 = vunpack.c.l.b16 %v709
        %v781 = vunpack.c.l.b16 %v710
        %v782 = vunpack.c.l.b16 %v711
        %v783 = vpack.c.b16 %v752, %v751
        %v784 = vpack.c.b16 %v754, %v753
        %v785 = vpack.c.b16 %v756, %v755
        %v786 = vpack.c.b16 %v758, %v757
        %v787 = vpack.c.b16 %v760, %v759
        %v788 = vpack.c.b16 %v762, %v761
        %v789 = vpack.c.b16 %v764, %v763
        %v790 = vpack.c.b16 %v766, %v765
        %v791 = vpack.c.b16 %v768, %v767
        %v792 = vpack.c.b16 %v770, %v769
        %v793 = vpack.c.b16 %v772, %v771
        %v794 = vpack.c.b16 %v774, %v773
        %v795 = vpack.c.b16 %v776, %v775
        %v796 = vpack.c.b16 %v778, %v777
        %v797 = vpack.c.b16 %v780, %v779
        %v798 = vpack.c.b16 %v782, %v781
        %815 = vmatprep.subr.bf16.mxu0 0
        %816 = vmatpush1.bf16.msra.mxu0 %v783
        %817 = vmatprep.subr.bf16.mxu0 0
        %818 = vmatpush1.bf16.msra.mxu0 %v784
        %819 = vmatprep.subr.bf16.mxu0 0
        %820 = vmatpush1.bf16.msra.mxu0 %v785
        %821 = vmatprep.subr.bf16.mxu0 0
        %822 = vmatpush1.bf16.msra.mxu0 %v786
        %823 = vmatprep.subr.bf16.mxu0 0
        %824 = vmatpush1.bf16.msra.mxu0 %v787
        %825 = vmatprep.subr.bf16.mxu0 0
        %826 = vmatpush1.bf16.msra.mxu0 %v788
        %827 = vmatprep.subr.bf16.mxu0 0
        %828 = vmatpush1.bf16.msra.mxu0 %v789
        %829 = vmatprep.subr.bf16.mxu0 0
        %830 = vmatpush1.bf16.msra.mxu0 %v790
        %831 = vmatprep.subr.bf16.mxu0 0
        %832 = vmatpush1.bf16.msra.mxu0 %v791
        %833 = vmatprep.subr.bf16.mxu0 0
        %834 = vmatpush1.bf16.msra.mxu0 %v792
        %835 = vmatprep.subr.bf16.mxu0 0
        %836 = vmatpush1.bf16.msra.mxu0 %v793
        %837 = vmatprep.subr.bf16.mxu0 0
        %838 = vmatpush1.bf16.msra.mxu0 %v794
        %839 = vmatprep.subr.bf16.mxu0 0
        %840 = vmatpush1.bf16.msra.mxu0 %v795
        %841 = vmatprep.subr.bf16.mxu0 0
        %842 = vmatpush1.bf16.msra.mxu0 %v796
        %843 = vmatprep.subr.bf16.mxu0 0
        %844 = vmatpush1.bf16.msra.mxu0 %v797
        %845 = vmatprep.subr.bf16.mxu0 0
        %846 = vmatpush1.bf16.msra.mxu0 %v798
        %847 = vmatprep.mubr.bf16.mxu0 %v677
        %848 = vmatmul.mubr.bf16.gmra.mrb[0].mxu0 %v676
        %v849 = vpop.f32.mrb[0].mxu0
        %v850 = vadd.f32 %v717, %v849
        %v851 = vpop.f32.mrb[0].mxu0
        %v852 = vpop.f32.mrb[0].mxu0
        %v853 = vadd.f32 %v717, %v852
        %v854 = vpop.f32.mrb[0].mxu0
        %855 = vmatprep.mubr.bf16.mxu0 %v679
        %856 = vmatmul.mubr.bf16.gmra.mrb[0].mxu0 %v678
        %v857 = vpop.f32.mrb[0].mxu0
        %v858 = vadd.f32 %v717, %v857
        %v859 = vpop.f32.mrb[0].mxu0
        %v860 = vpop.f32.mrb[0].mxu0
        %v861 = vadd.f32 %v717, %v860
        %v862 = vpop.f32.mrb[0].mxu0
        %863 = vdwg.mxu0
        %v864 = vmul.f32 %v850, 0.5
        %v865 = vmul.f32 %v853, 0.5
        %v866 = vmul.f32 %v858, 0.5
        %v867 = vmul.f32 %v861, 0.5
        %v868 = vtanh.pop %v864
        %v869 = vtanh.pop %v865
        %v870 = vtanh.pop %v866
        %v871 = vtanh.pop %v867
        %v872 = vmul.f32 %v868, 0.5
        %v873 = vmul.f32 %v869, 0.5
        %v874 = vmul.f32 %v870, 0.5
        %v875 = vmul.f32 %v871, 0.5
        %v876 = vadd.f32 %v872, 0.5
        %v877 = vadd.f32 %v873, 0.5
        %v878 = vadd.f32 %v874, 0.5
        %v879 = vadd.f32 %v875, 0.5
        %vm880 = vcmask 15360
        %881 = vst.msk [vmem:[%s372] sm:$0xff] %vm880, %v876
        %882 = vst.msk [vmem:[%s372 + $0x8] sm:$0xff] %vm880, %v877
        %883 = vst.msk [vmem:[%s372 + $0x10] sm:$0xff] %vm880, %v878
        %884 = vst.msk [vmem:[%s372 + $0x18] sm:$0xff] %vm880, %v879
        %s885 = smul.u32 4, %s25
        %p886 = scmp.lt.s32.totalorder %s885, 7
        %s887 = scalar_select %p886, %s885, 7
        %s888 = smul.addr %s887, 8
        %s889 = scalar_lea.vmem %s9, %s888
        %s890 = sand.u32 %s253, 1
        %s891 = scalar_lea.sflag [#allocation3], %s890
        %s892 = sand.u32 %s253, 1
        %s893 = smul.addr %s892, 16
        %s894 = scalar_lea.vmem [#allocation2], %s893
        // Predicated region
        $region57: #{advnet_forward.1} parent=55 // pred_check
          %p895 = pneg %p237
        $region58: #{advnet_forward.1} parent=55 // pred_check_branch
          %897 = sbr.rel (%p895) target = $region60
        $region59: #{advnet_forward.1} parent=55 // pred_region
          %s898 = smul.u32 4, %s25
        $region60: #{advnet_forward.1} parent=55 // pred_fallthru
          _
        // Predicated region
        $region61: #{advnet_forward.1} parent=55 // pred_check
          %p899 = pneg %p263
        $region62: #{advnet_forward.1} parent=55 // pred_check_branch
          %901 = sbr.rel (%p899) target = $region64
        $region63: #{advnet_forward.1} parent=55 // pred_region
          %s902 = smul.u32 4, %s25
          %s904 = ssub.s32 256, 256
          %905 = vsyncadd %s891, %s904
          %s906 = smul.addr %s902, 64
          %s907 = scalar_lea.hbm %s10, %s906
          %s908 = sshll.u32 %s894, 4
          %s909 = int_to_ptr.vmem [resolvable:$true] %s908
          %914 = dma.vmem_to_hbm [thread:$0]  %s909, 256, %s907, %s891, 64, 64, 4
        $region64: #{advnet_forward.1} parent=55 // pred_fallthru
          _
      $region56: #{advnet_forward.1} parent=5 // pred_fallthru
        _
      %p915 = scmp.le.s32.totalorder 2, %s20
      // Predicated region
      $region65: #{advnet_forward.1} parent=5 // pred_check
        %p916 = pneg %p915
      $region66: #{advnet_forward.1} parent=5 // pred_check_branch
        %918 = sbr.rel (%p916) target = $region68
      $region67: #{advnet_forward.1} parent=5 // pred_region
        %s919 = ssub.s32 %s20, 2
        // Predicated region
        $region69: #{advnet_forward.1} parent=67 // pred_check
          %p920 = pneg %p243
        $region70: #{advnet_forward.1} parent=67 // pred_check_branch
          %922 = sbr.rel (%p920) target = $region72
        $region71: #{advnet_forward.1} parent=67 // pred_region
          %s923 = smul.u32 4, %s26
          %p924 = scmp.lt.s32.totalorder %s923, 7
          %s925 = scalar_select %p924, %s923, 7
          %s926 = smul.addr %s925, 8
          %s927 = scalar_lea.vmem %s9, %s926
        $region72: #{advnet_forward.1} parent=67 // pred_fallthru
          _
        // Predicated region
        $region73: #{advnet_forward.1} parent=67 // pred_check
          %p928 = pneg %p269
        $region74: #{advnet_forward.1} parent=67 // pred_check_branch
          %930 = sbr.rel (%p928) target = $region76
        $region75: #{advnet_forward.1} parent=67 // pred_region
          %s931 = sand.u32 %s254, 1
          %s932 = scalar_lea.sflag [#allocation3], %s931
          %s933 = sand.u32 %s254, 1
          %s934 = smul.addr %s933, 16
          %s935 = scalar_lea.vmem [#allocation2], %s934
          %936 = dma.done %s932, 256
        $region76: #{advnet_forward.1} parent=67 // pred_fallthru
          _
      $region68: #{advnet_forward.1} parent=5 // pred_fallthru
        _
    $region6: #{advnet_forward.1} parent=1 // loop_footer
      %s24 = sadd.s32 1, %s20
    $region7: #{advnet_forward.1} parent=1 // loop_footer_branch
      %19 = sbr.rel target = $region3
    $region8: #{advnet_forward.1} parent=1 // loop_exit
      _
    %937 = vsyncpa [#allocation3], 1
    %s938 = scalar_lea.sflag [#allocation3], 1
    %939 = vsyncpa %s938, 1

</llo_original>
